<compile_context>
chip_gen: v7x
topology: tpu7x:2x2x1
jax: 0.10.0
libtpu: 0.0.40
codegen_flags: <defaults>
</compile_context>

<pallas_src>
import jax
import jax.numpy as jnp
import numpy as np
from jax import lax
from jax.experimental import pallas as pl
from jax.experimental.pallas import tpu as pltpu

BN_EPS = 1e-5


def subspace_kernel(x_ref, s_dws_ref, b_dws_ref, w_pt_ref, b_pt_ref, o_ref):
    # x_ref:      (Bt, C, H, W)
    # s_dws_ref:  (C, 1, 1)   folded depthwise-conv * BN scale
    # b_dws_ref:  (C, 1, 1)   folded depthwise-conv * BN bias
    # w_pt_ref:   (C, 1, 1)   folded pointwise-conv * BN weights
    # b_pt_ref:   (1, 1)      folded pointwise-conv * BN bias
    x = x_ref[...]                                        # (Bt, C, H, W)
    bt, c, h, w = x.shape

    # --- depthwise 1x1 conv + BN (pre-folded) + ReLU ------------------------
    t = jnp.maximum(x * s_dws_ref[...] + b_dws_ref[...], 0.0)

    # --- MaxPool2d(kernel=3, stride=1, padding=1), separable passes ---------
    # pltpu.roll only accepts non-negative shifts: shift=+1 brings the
    # "index-1" neighbour, shift=(size-1) brings the "index+1" neighbour
    # (circular), and the boundary columns/rows are masked back to the centre
    # value, which is equivalent to -inf padding.
    t3 = t.reshape(bt * c, h, w)                          # leading-dim merge (free)

    w_idx = lax.broadcasted_iota(jnp.int32, t3.shape, 2)
    left = jnp.where(w_idx == 0, t3, pltpu.roll(t3, shift=1, axis=2))
    right = jnp.where(w_idx == w - 1, t3, pltpu.roll(t3, shift=w - 1, axis=2))
    wmax = jnp.maximum(jnp.maximum(left, right), t3)

    h_idx = lax.broadcasted_iota(jnp.int32, t3.shape, 1)
    up = jnp.where(h_idx == 0, wmax, pltpu.roll(wmax, shift=1, axis=1))
    down = jnp.where(h_idx == h - 1, wmax, pltpu.roll(wmax, shift=h - 1, axis=1))
    pooled = jnp.maximum(jnp.maximum(up, down), wmax).reshape(bt, c, h, w)

    # --- pointwise 1x1 conv (C -> 1) + BN (pre-folded) + ReLU ---------------
    # C is a leading (untiled) axis: this is a cheap VPU reduction, not an MXU
    # matmul with K=C.
    a = jnp.sum(pooled * w_pt_ref[...], axis=1, keepdims=True) + b_pt_ref[...]
    a = jnp.maximum(a, 0.0)                               # (Bt, 1, H, W)

    # --- softmax over the flattened spatial extent (H*W) --------------------
    m = jnp.max(jnp.max(a, axis=3, keepdims=True), axis=2, keepdims=True)
    e = jnp.exp(a - m)
    s = jnp.sum(jnp.sum(e, axis=3, keepdims=True), axis=2, keepdims=True)
    attn = e / s                                          # (Bt, 1, H, W)

    # --- gate + residual:  y = attn * x + x ---------------------------------
    # NOTE: output last dim W < 128 lanes -> masked stores; a lane-dense
    # (B, C, H*W) out layout is an A/B candidate but needs an in-kernel
    # relayout across (8,128) tiles, so the natural layout is kept here.
    o_ref[...] = (x * (attn + 1.0)).astype(o_ref.dtype)


def subspace_forward(x, w_dws, b_dws, g1, beta1, mean1, var1,
                     w_pt, b_pt, g2, beta2, mean2, var2,
                     *, bn_eps=BN_EPS, block_batch=None):
    B, C, H, W = x.shape

    # Fold conv_dws + bn_dws (eval mode) into a per-channel affine.
    inv1 = g1 / jnp.sqrt(var1 + bn_eps)                   # (C,)
    s_dws = (w_dws * inv1).reshape(C, 1, 1)
    b_dws_f = ((b_dws - mean1) * inv1 + beta1).reshape(C, 1, 1)

    # Fold conv_point + bn_point (eval mode) into weights + scalar bias.
    inv2 = g2 / jnp.sqrt(var2 + bn_eps)                   # (1,)
    w_pt_f = (w_pt * inv2).reshape(C, 1, 1)
    b_pt_f = ((b_pt - mean2) * inv2 + beta2).reshape(1, 1)

    # Batch tile: biggest tile keeping one block under ~4 MiB (double-buffered
    # in+out stays well within the default scoped VMEM on v5e/v6e/v7x).
    if block_batch is None:
        row_bytes = C * H * W * x.dtype.itemsize
        budget = 4 * 1024 * 1024
        block_batch = max(1, min(B, budget // max(row_bytes, 1)))
        while B % block_batch:                            # keep the grid exact
            block_batch -= 1
    bt = block_batch
    grid = (B // bt,)

    return pl.pallas_call(
        subspace_kernel,
        out_shape=jax.ShapeDtypeStruct((B, C, H, W), x.dtype),
        grid_spec=pltpu.PrefetchScalarGridSpec(
            num_scalar_prefetch=0,
            grid=grid,
            in_specs=[
                pl.BlockSpec((bt, C, H, W), lambda i: (i, 0, 0, 0)),
                pl.BlockSpec((C, 1, 1), lambda i: (0, 0, 0)),   # resident
                pl.BlockSpec((C, 1, 1), lambda i: (0, 0, 0)),   # resident
                pl.BlockSpec((C, 1, 1), lambda i: (0, 0, 0)),   # resident
                pl.BlockSpec((1, 1), lambda i: (0, 0)),          # resident
            ],
            out_specs=pl.BlockSpec((bt, C, H, W), lambda i: (i, 0, 0, 0)),
        ),
        compiler_params=pltpu.CompilerParams(
            dimension_semantics=("parallel",)),
    )(x, s_dws, b_dws_f, w_pt_f, b_pt_f)


def subspace_ref(x, w_dws, b_dws, g1, beta1, mean1, var1,
                 w_pt, b_pt, g2, beta2, mean2, var2, *, bn_eps=BN_EPS):
    """Pure-JAX reference mirroring the PyTorch forward (eval-mode BN)."""
    B, C, H, W = x.shape
    t = x * w_dws.reshape(1, C, 1, 1) + b_dws.reshape(1, C, 1, 1)
    t = (t - mean1.reshape(1, C, 1, 1)) / jnp.sqrt(var1.reshape(1, C, 1, 1) + bn_eps)
    t = t * g1.reshape(1, C, 1, 1) + beta1.reshape(1, C, 1, 1)
    t = jax.nn.relu(t)
    pooled = lax.reduce_window(
        t, -jnp.inf, lax.max,
        window_dimensions=(1, 1, 3, 3), window_strides=(1, 1, 1, 1),
        padding=((0, 0), (0, 0), (1, 1), (1, 1)))
    a = jnp.sum(pooled * w_pt.reshape(1, C, 1, 1), axis=1, keepdims=True) \
        + b_pt.reshape(1, 1, 1, 1)
    a = (a - mean2.reshape(1, 1, 1, 1)) / jnp.sqrt(var2.reshape(1, 1, 1, 1) + bn_eps)
    a = a * g2.reshape(1, 1, 1, 1) + beta2.reshape(1, 1, 1, 1)
    a = jax.nn.relu(a)
    attn = jax.nn.softmax(a.reshape(B, 1, H * W), axis=2).reshape(B, 1, H, W)
    return attn * x + x


if __name__ == "__main__":
    # SubSpace(nin=4) on a (B, C, H, W) = (2, 4, 16, 16) input.
    B, C, H, W = 2, 4, 16, 16

    key = jax.random.PRNGKey(0)
    ks = jax.random.split(key, 13)

    x = jax.random.normal(ks[0], (B, C, H, W), dtype=jnp.float32)

    # conv_dws (depthwise 1x1) + bn_dws parameters (eval-mode running stats).
    w_dws = jax.random.normal(ks[1], (C,), jnp.float32) * 0.5
    b_dws = jax.random.normal(ks[2], (C,), jnp.float32) * 0.1
    g1 = 1.0 + 0.1 * jax.random.normal(ks[3], (C,), jnp.float32)
    beta1 = 0.1 * jax.random.normal(ks[4], (C,), jnp.float32)
    mean1 = 0.1 * jax.random.normal(ks[5], (C,), jnp.float32)
    var1 = jax.random.uniform(ks[6], (C,), jnp.float32, 0.5, 1.5)

    # conv_point (1x1, C->1) + bn_point parameters.
    w_pt = jax.random.normal(ks[7], (C,), jnp.float32) * 0.3
    b_pt = 0.1 * jax.random.normal(ks[8], (1,), jnp.float32)
    g2 = 1.0 + 0.1 * jax.random.normal(ks[9], (1,), jnp.float32)
    beta2 = 0.1 * jax.random.normal(ks[10], (1,), jnp.float32)
    mean2 = 0.1 * jax.random.normal(ks[11], (1,), jnp.float32)
    var2 = jax.random.uniform(ks[12], (1,), jnp.float32, 0.5, 1.5)

    args = (x, w_dws, b_dws, g1, beta1, mean1, var1,
            w_pt, b_pt, g2, beta2, mean2, var2)

    out = jax.block_until_ready(subspace_forward(*args))
    ref = subspace_ref(*args)
    np.testing.assert_allclose(np.asarray(out), np.asarray(ref),
                               rtol=1e-5, atol=1e-5)
    print("KERNEL_OK")
</pallas_src>

<mosaic_0001>
module attributes {stable_mosaic.version = 11 : i64} {
  func.func @subspace_kernel(%arg0: i32, %arg1: memref<2x4x16x16xf32, #tpu.memory_space<vmem>>, %arg2: memref<4x1x1xf32, #tpu.memory_space<vmem>>, %arg3: memref<4x1x1xf32, #tpu.memory_space<vmem>>, %arg4: memref<4x1x1xf32, #tpu.memory_space<vmem>>, %arg5: memref<1x1xf32, #tpu.memory_space<vmem>>, %arg6: memref<2x4x16x16xf32, #tpu.memory_space<vmem>>) attributes {dimension_semantics = [#tpu.dimension_semantics<parallel>], iteration_bounds = array<i64: 1>, scalar_prefetch = 0 : i64, scratch_operands = 0 : i64, tpu.core_type = #tpu.core_type<tc>, window_params = [{transform_indices = @transform_0, window_bounds = array<i64: 2, 4, 16, 16>}, {pipeline_mode = #tpu.pipeline_mode<synchronous>, transform_indices = @transform_1, window_bounds = array<i64: 4, 1, 1>}, {pipeline_mode = #tpu.pipeline_mode<synchronous>, transform_indices = @transform_2, window_bounds = array<i64: 4, 1, 1>}, {pipeline_mode = #tpu.pipeline_mode<synchronous>, transform_indices = @transform_3, window_bounds = array<i64: 4, 1, 1>}, {pipeline_mode = #tpu.pipeline_mode<synchronous>, transform_indices = @transform_4, window_bounds = array<i64: 1, 1>}, {transform_indices = @transform_5, window_bounds = array<i64: 2, 4, 16, 16>}]} {
    %c0 = arith.constant 0 : index
    %c0_0 = arith.constant 0 : index
    %c0_1 = arith.constant 0 : index
    %c0_2 = arith.constant 0 : index
    %0 = vector.load %arg1[%c0, %c0_0, %c0_1, %c0_2] : memref<2x4x16x16xf32, #tpu.memory_space<vmem>>, vector<2x4x16x16xf32>
    %c0_3 = arith.constant 0 : index
    %c0_4 = arith.constant 0 : index
    %c0_5 = arith.constant 0 : index
    %1 = vector.load %arg2[%c0_3, %c0_4, %c0_5] : memref<4x1x1xf32, #tpu.memory_space<vmem>>, vector<4x1x1xf32>
    %2 = vector.shape_cast %1 : vector<4x1x1xf32> to vector<1x4x1x1xf32>
    %3 = vector.broadcast %2 : vector<1x4x1x1xf32> to vector<2x4x16x16xf32>
    %4 = arith.mulf %0, %3 : vector<2x4x16x16xf32>
    %c0_6 = arith.constant 0 : index
    %c0_7 = arith.constant 0 : index
    %c0_8 = arith.constant 0 : index
    %5 = vector.load %arg3[%c0_6, %c0_7, %c0_8] : memref<4x1x1xf32, #tpu.memory_space<vmem>>, vector<4x1x1xf32>
    %6 = vector.shape_cast %5 : vector<4x1x1xf32> to vector<1x4x1x1xf32>
    %7 = vector.broadcast %6 : vector<1x4x1x1xf32> to vector<2x4x16x16xf32>
    %8 = arith.addf %4, %7 : vector<2x4x16x16xf32>
    %cst = arith.constant 0.000000e+00 : f32
    %9 = vector.broadcast %cst : f32 to vector<2x4x16x16xf32>
    %10 = arith.maximumf %8, %9 : vector<2x4x16x16xf32>
    %11 = vector.shape_cast %10 : vector<2x4x16x16xf32> to vector<8x16x16xf32>
    %12 = tpu.iota {dimensions = array<i32: 2>} : vector<8x16x16xi32>
    %c0_i32 = arith.constant 0 : i32
    %13 = vector.broadcast %c0_i32 : i32 to vector<8x16x16xi32>
    %14 = arith.cmpi eq, %12, %13 : vector<8x16x16xi32>
    %c1_i32 = arith.constant 1 : i32
    %15 = tpu.dynamic_rotate %11 by %c1_i32 dim 2 : vector<8x16x16xf32>, i32 -> vector<8x16x16xf32>
    %16 = arith.select %14, %11, %15 : vector<8x16x16xi1>, vector<8x16x16xf32>
    %c15_i32 = arith.constant 15 : i32
    %17 = vector.broadcast %c15_i32 : i32 to vector<8x16x16xi32>
    %18 = arith.cmpi eq, %12, %17 : vector<8x16x16xi32>
    %c15_i32_9 = arith.constant 15 : i32
    %19 = tpu.dynamic_rotate %11 by %c15_i32_9 dim 2 : vector<8x16x16xf32>, i32 -> vector<8x16x16xf32>
    %20 = arith.select %18, %11, %19 : vector<8x16x16xi1>, vector<8x16x16xf32>
    %21 = arith.maximumf %16, %20 : vector<8x16x16xf32>
    %22 = arith.maximumf %21, %11 : vector<8x16x16xf32>
    %23 = tpu.iota {dimensions = array<i32: 1>} : vector<8x16x16xi32>
    %c0_i32_10 = arith.constant 0 : i32
    %24 = vector.broadcast %c0_i32_10 : i32 to vector<8x16x16xi32>
    %25 = arith.cmpi eq, %23, %24 : vector<8x16x16xi32>
    %c1_i32_11 = arith.constant 1 : i32
    %26 = tpu.dynamic_rotate %22 by %c1_i32_11 dim 1 : vector<8x16x16xf32>, i32 -> vector<8x16x16xf32>
    %27 = arith.select %25, %22, %26 : vector<8x16x16xi1>, vector<8x16x16xf32>
    %c15_i32_12 = arith.constant 15 : i32
    %28 = vector.broadcast %c15_i32_12 : i32 to vector<8x16x16xi32>
    %29 = arith.cmpi eq, %23, %28 : vector<8x16x16xi32>
    %c15_i32_13 = arith.constant 15 : i32
    %30 = tpu.dynamic_rotate %22 by %c15_i32_13 dim 1 : vector<8x16x16xf32>, i32 -> vector<8x16x16xf32>
    %31 = arith.select %29, %22, %30 : vector<8x16x16xi1>, vector<8x16x16xf32>
    %32 = arith.maximumf %27, %31 : vector<8x16x16xf32>
    %33 = arith.maximumf %32, %22 : vector<8x16x16xf32>
    %34 = vector.shape_cast %33 : vector<8x16x16xf32> to vector<2x4x16x16xf32>
    %c0_14 = arith.constant 0 : index
    %c0_15 = arith.constant 0 : index
    %c0_16 = arith.constant 0 : index
    %35 = vector.load %arg4[%c0_14, %c0_15, %c0_16] : memref<4x1x1xf32, #tpu.memory_space<vmem>>, vector<4x1x1xf32>
    %36 = vector.shape_cast %35 : vector<4x1x1xf32> to vector<1x4x1x1xf32>
    %37 = vector.broadcast %36 : vector<1x4x1x1xf32> to vector<2x4x16x16xf32>
    %38 = arith.mulf %34, %37 : vector<2x4x16x16xf32>
    %cst_17 = arith.constant dense<0.000000e+00> : vector<2x16x16xf32>
    %39 = vector.multi_reduction <add>, %38, %cst_17 [1] : vector<2x4x16x16xf32> to vector<2x16x16xf32>
    %40 = vector.shape_cast %39 : vector<2x16x16xf32> to vector<2x1x16x16xf32>
    %c0_18 = arith.constant 0 : index
    %c0_19 = arith.constant 0 : index
    %41 = vector.load %arg5[%c0_18, %c0_19] : memref<1x1xf32, #tpu.memory_space<vmem>>, vector<1x1xf32>
    %42 = vector.shape_cast %41 : vector<1x1xf32> to vector<1x1x1x1xf32>
    %43 = vector.broadcast %42 : vector<1x1x1x1xf32> to vector<2x1x16x16xf32>
    %44 = arith.addf %40, %43 : vector<2x1x16x16xf32>
    %cst_20 = arith.constant 0.000000e+00 : f32
    %45 = vector.broadcast %cst_20 : f32 to vector<2x1x16x16xf32>
    %46 = arith.maximumf %44, %45 : vector<2x1x16x16xf32>
    %cst_21 = arith.constant dense<0xFF800000> : vector<2x1x16xf32>
    %47 = vector.multi_reduction <maximumf>, %46, %cst_21 [3] : vector<2x1x16x16xf32> to vector<2x1x16xf32>
    %48 = vector.shape_cast %47 : vector<2x1x16xf32> to vector<2x1x16x1xf32>
    %cst_22 = arith.constant dense<0xFF800000> : vector<2x1x1xf32>
    %49 = vector.multi_reduction <maximumf>, %48, %cst_22 [2] : vector<2x1x16x1xf32> to vector<2x1x1xf32>
    %50 = vector.shape_cast %49 : vector<2x1x1xf32> to vector<2x1x1x1xf32>
    %51 = vector.broadcast %50 : vector<2x1x1x1xf32> to vector<2x1x16x16xf32>
    %52 = arith.subf %46, %51 : vector<2x1x16x16xf32>
    %53 = math.exp %52 : vector<2x1x16x16xf32>
    %cst_23 = arith.constant dense<0.000000e+00> : vector<2x1x16xf32>
    %54 = vector.multi_reduction <add>, %53, %cst_23 [3] : vector<2x1x16x16xf32> to vector<2x1x16xf32>
    %55 = vector.shape_cast %54 : vector<2x1x16xf32> to vector<2x1x16x1xf32>
    %cst_24 = arith.constant dense<0.000000e+00> : vector<2x1x1xf32>
    %56 = vector.multi_reduction <add>, %55, %cst_24 [2] : vector<2x1x16x1xf32> to vector<2x1x1xf32>
    %57 = vector.shape_cast %56 : vector<2x1x1xf32> to vector<2x1x1x1xf32>
    %58 = vector.broadcast %57 : vector<2x1x1x1xf32> to vector<2x1x16x16xf32>
    %59 = arith.divf %53, %58 : vector<2x1x16x16xf32>
    %cst_25 = arith.constant 1.000000e+00 : f32
    %60 = vector.broadcast %cst_25 : f32 to vector<2x1x16x16xf32>
    %61 = arith.addf %59, %60 : vector<2x1x16x16xf32>
    %62 = vector.broadcast %61 : vector<2x1x16x16xf32> to vector<2x4x16x16xf32>
    %63 = arith.mulf %0, %62 : vector<2x4x16x16xf32>
    %c0_26 = arith.constant 0 : index
    %c0_27 = arith.constant 0 : index
    %c0_28 = arith.constant 0 : index
    %c0_29 = arith.constant 0 : index
    %64 = vector.load %arg6[%c0_26, %c0_27, %c0_28, %c0_29] : memref<2x4x16x16xf32, #tpu.memory_space<vmem>>, vector<2x4x16x16xf32>
    tpu.vector_store %arg6[%c0_26, %c0_27, %c0_28, %c0_29], %63 {strides = array<i32>} : memref<2x4x16x16xf32, #tpu.memory_space<vmem>>, vector<2x4x16x16xf32>,
    return
  }
  func.func @transform_0(%arg0: i32) -> (i32, i32, i32, i32) {
    %c0_i32 = arith.constant 0 : i32
    %c0_i32_0 = arith.constant 0 : i32
    %c0_i32_1 = arith.constant 0 : i32
    %c0_i32_2 = arith.constant 0 : i32
    return %arg0, %c0_i32, %c0_i32_0, %c0_i32_1 : i32, i32, i32, i32
  }
  func.func @transform_1(%arg0: i32) -> (i32, i32, i32) {
    %c0_i32 = arith.constant 0 : i32
    %c0_i32_0 = arith.constant 0 : i32
    %c0_i32_1 = arith.constant 0 : i32
    %c0_i32_2 = arith.constant 0 : i32
    return %c0_i32, %c0_i32_0, %c0_i32_1 : i32, i32, i32
  }
  func.func @transform_2(%arg0: i32) -> (i32, i32, i32) {
    %c0_i32 = arith.constant 0 : i32
    %c0_i32_0 = arith.constant 0 : i32
    %c0_i32_1 = arith.constant 0 : i32
    %c0_i32_2 = arith.constant 0 : i32
    return %c0_i32, %c0_i32_0, %c0_i32_1 : i32, i32, i32
  }
  func.func @transform_3(%arg0: i32) -> (i32, i32, i32) {
    %c0_i32 = arith.constant 0 : i32
    %c0_i32_0 = arith.constant 0 : i32
    %c0_i32_1 = arith.constant 0 : i32
    %c0_i32_2 = arith.constant 0 : i32
    return %c0_i32, %c0_i32_0, %c0_i32_1 : i32, i32, i32
  }
  func.func @transform_4(%arg0: i32) -> (i32, i32) {
    %c0_i32 = arith.constant 0 : i32
    %c0_i32_0 = arith.constant 0 : i32
    %c0_i32_1 = arith.constant 0 : i32
    return %c0_i32, %c0_i32_0 : i32, i32
  }
  func.func @transform_5(%arg0: i32) -> (i32, i32, i32, i32) {
    %c0_i32 = arith.constant 0 : i32
    %c0_i32_0 = arith.constant 0 : i32
    %c0_i32_1 = arith.constant 0 : i32
    %c0_i32_2 = arith.constant 0 : i32
    return %arg0, %c0_i32, %c0_i32_0, %c0_i32_1 : i32, i32, i32, i32
  }
}

</mosaic_0001>

<llo_original>
// kernel: tpu_custom_call.1
$region0: #{tpu_custom_call.1}
  #allocation0 [shape = 'u32[]', space=smem, size = 0x4, offset = 0x4, fixed_abs, tag = 'smem constant byte address 0x4 - core index']
  #allocation1 [shape = 'u32[144,128]{1,0:T(1,128)}', space=vmem, size = 0x12000, scoped, tag = 'internal scratch']
  #allocation2 [shape = 'f32[1,1]{1,0:T(1,128)S(1)}', space=vmem, size = 0x200, scoped, tag = 'scoped memory for tpu_custom_call.1']
  %s0 = inlined_call_operand.hbm [shape: f32[2,4,16,16], index: 0, kind: input, shape index: {}]
  %s1 = inlined_call_operand.vmem [shape: f32[4,1,1], index: 1, kind: input, shape index: {}]
  %s2 = inlined_call_operand.vmem [shape: f32[4,1,1], index: 2, kind: input, shape index: {}]
  %s3 = inlined_call_operand.vmem [shape: f32[4,1,1], index: 3, kind: input, shape index: {}]
  %s4 = inlined_call_operand.<no memory space> [shape: f32[1,1], index: 4, kind: input, shape index: {}]
  %s5 = inlined_call_operand.hbm [shape: f32[2,4,16,16], index: 5, kind: output, shape index: {}]
  %s6 = sld [smem:[#allocation0]]
  $region34: #{tpu_custom_call.1} parent=0
    _
  %s8 = ssub.s32 1, %s6
  %s9 = scalar_select 0, %s8, %s6
  %v10 = vstv %s4
  %11 = vst [vmem:[#allocation2] sm:$0x1] %v10
  $region1: #{tpu_custom_call.1} parent=0
    #allocation3 [shape = 'u8[65536]{0}', space=vmem, size = 0x10000, scoped, tag = 'input window, operand 0, single buffered']
    #allocation4 [shape = 's32[1]{0}', space=sflag, size = 0x4, scoped, tag = 'scoped memory for tpu_custom_call.1']
    #allocation5 [shape = 's32[1]{0}', space=sflag, size = 0x4, scoped, tag = 'scoped memory for tpu_custom_call.1']
    #allocation6 [shape = 'u8[65536]{0}', space=vmem, size = 0x10000, scoped, tag = 'output window, operand 0, single buffered']
    %12 = vsyncpa [#allocation4], 0
    %13 = vsyncpa [#allocation5], 0
    // Predicated region
    $region2: #{tpu_custom_call.1} parent=1 // pred_check
      _
    $region3: #{tpu_custom_call.1} parent=1 // pred_check_branch
      %15 = sbr.rel (0) target = $region5
    $region4: #{tpu_custom_call.1} parent=1 // pred_region
      %s17 = ssub.s32 2048, 2048
      %18 = vsyncadd [#allocation4], %s17
      %s19 = sshll.u32 [#allocation3], 4
      %s20 = int_to_ptr.vmem [resolvable:$true] %s19
      %25 = dma.hbm_to_vmem [thread:$0]  %s0, 2048, %s20, [#allocation4], 128, 128, 8
    $region5: #{tpu_custom_call.1} parent=1 // pred_fallthru
      _
    // Predicated region
    $region6: #{tpu_custom_call.1} parent=1 // pred_check
      _
    $region7: #{tpu_custom_call.1} parent=1 // pred_check_branch
      %27 = sbr.rel (0) target = $region9
    $region8: #{tpu_custom_call.1} parent=1 // pred_region
      _
    $region9: #{tpu_custom_call.1} parent=1 // pred_fallthru
      _
    // Predicated region
    $region10: #{tpu_custom_call.1} parent=1 // pred_check
      _
    $region11: #{tpu_custom_call.1} parent=1 // pred_check_branch
      %29 = sbr.rel (0) target = $region13
    $region12: #{tpu_custom_call.1} parent=1 // pred_region
      _
    $region13: #{tpu_custom_call.1} parent=1 // pred_fallthru
      _
    // Predicated region
    $region14: #{tpu_custom_call.1} parent=1 // pred_check
      _
    $region15: #{tpu_custom_call.1} parent=1 // pred_check_branch
      %31 = sbr.rel (0) target = $region17
    $region16: #{tpu_custom_call.1} parent=1 // pred_region
      _
    $region17: #{tpu_custom_call.1} parent=1 // pred_fallthru
      _
    // Predicated region
    $region18: #{tpu_custom_call.1} parent=1 // pred_check
      _
    $region19: #{tpu_custom_call.1} parent=1 // pred_check_branch
      %33 = sbr.rel (0) target = $region21
    $region20: #{tpu_custom_call.1} parent=1 // pred_region
      _
    $region21: #{tpu_custom_call.1} parent=1 // pred_fallthru
      _
    // Predicated region
    $region22: #{tpu_custom_call.1} parent=1 // pred_check
      _
    $region23: #{tpu_custom_call.1} parent=1 // pred_check_branch
      %35 = sbr.rel (0) target = $region25
    $region24: #{tpu_custom_call.1} parent=1 // pred_region
      %36 = dma.done [#allocation4], 2048
    $region25: #{tpu_custom_call.1} parent=1 // pred_fallthru
      _
    %v37 = vld [vmem:[#allocation3] sm:$0xff]
    %v38 = vld [vmem:[#allocation3 + $0x8] sm:$0xff]
    %v39 = vld [vmem:[#allocation3 + $0x10] sm:$0xff]
    %v40 = vld [vmem:[#allocation3 + $0x18] sm:$0xff]
    %v41 = vld [vmem:[#allocation3 + $0x20] sm:$0xff]
    %v42 = vld [vmem:[#allocation3 + $0x28] sm:$0xff]
    %v43 = vld [vmem:[#allocation3 + $0x30] sm:$0xff]
    %v44 = vld [vmem:[#allocation3 + $0x38] sm:$0xff]
    %v45 = vld [vmem:[#allocation3 + $0x40] sm:$0xff]
    %v46 = vld [vmem:[#allocation3 + $0x48] sm:$0xff]
    %v47 = vld [vmem:[#allocation3 + $0x50] sm:$0xff]
    %v48 = vld [vmem:[#allocation3 + $0x58] sm:$0xff]
    %v49 = vld [vmem:[#allocation3 + $0x60] sm:$0xff]
    %v50 = vld [vmem:[#allocation3 + $0x68] sm:$0xff]
    %v51 = vld [vmem:[#allocation3 + $0x70] sm:$0xff]
    %v52 = vld [vmem:[#allocation3 + $0x78] sm:$0xff]
    %v53 = vld [vmem:[%s1] sm:$0x1]
    %v54 = vld [vmem:[%s1 + $0x1] sm:$0x1]
    %v55 = vld [vmem:[%s1 + $0x2] sm:$0x1]
    %v56 = vld [vmem:[%s1 + $0x3] sm:$0x1]
    %v61 = vlaneseq
    %v62 = vshrl.u32 %v61, 7
    %v63 = vsub.s32 0, %v62
    %v64 = vrot.slane %v53, %v63
    %v65 = vlaneseq
    %v66 = vshrl.u32 %v65, 7
    %v67 = vsub.s32 0, %v66
    %v68 = vrot.slane %v54, %v67
    %v69 = vlaneseq
    %v70 = vshrl.u32 %v69, 7
    %v71 = vsub.s32 0, %v70
    %v72 = vrot.slane %v55, %v71
    %v73 = vlaneseq
    %v74 = vshrl.u32 %v73, 7
    %v75 = vsub.s32 0, %v74
    %v76 = vrot.slane %v56, %v75
    %77 = vset.pattern.permute.xlu0 0
    %78 = vperm.xlu0 %77, %v64
    %v79 = vpop.permute.xlu0 %78
    %81 = vset.pattern.permute.xlu0 0
    %82 = vperm.xlu0 %81, %v68
    %v83 = vpop.permute.xlu0 %82
    %85 = vset.pattern.permute.xlu0 0
    %86 = vperm.xlu0 %85, %v72
    %v87 = vpop.permute.xlu0 %86
    %89 = vset.pattern.permute.xlu0 0
    %90 = vperm.xlu0 %89, %v76
    %v91 = vpop.permute.xlu0 %90
    %v93 = vmul.f32 %v37, %v79
    %v94 = vmul.f32 %v38, %v79
    %v95 = vmul.f32 %v39, %v83
    %v96 = vmul.f32 %v40, %v83
    %v97 = vmul.f32 %v41, %v87
    %v98 = vmul.f32 %v42, %v87
    %v99 = vmul.f32 %v43, %v91
    %v100 = vmul.f32 %v44, %v91
    %v101 = vmul.f32 %v45, %v79
    %v102 = vmul.f32 %v46, %v79
    %v103 = vmul.f32 %v47, %v83
    %v104 = vmul.f32 %v48, %v83
    %v105 = vmul.f32 %v49, %v87
    %v106 = vmul.f32 %v50, %v87
    %v107 = vmul.f32 %v51, %v91
    %v108 = vmul.f32 %v52, %v91
    %v109 = vld [vmem:[%s2] sm:$0x1]
    %v110 = vld [vmem:[%s2 + $0x1] sm:$0x1]
    %v111 = vld [vmem:[%s2 + $0x2] sm:$0x1]
    %v112 = vld [vmem:[%s2 + $0x3] sm:$0x1]
    %v117 = vlaneseq
    %v118 = vshrl.u32 %v117, 7
    %v119 = vsub.s32 0, %v118
    %v120 = vrot.slane %v109, %v119
    %v121 = vlaneseq
    %v122 = vshrl.u32 %v121, 7
    %v123 = vsub.s32 0, %v122
    %v124 = vrot.slane %v110, %v123
    %v125 = vlaneseq
    %v126 = vshrl.u32 %v125, 7
    %v127 = vsub.s32 0, %v126
    %v128 = vrot.slane %v111, %v127
    %v129 = vlaneseq
    %v130 = vshrl.u32 %v129, 7
    %v131 = vsub.s32 0, %v130
    %v132 = vrot.slane %v112, %v131
    %133 = vset.pattern.permute.xlu0 0
    %134 = vperm.xlu0 %133, %v120
    %v135 = vpop.permute.xlu0 %134
    %137 = vset.pattern.permute.xlu0 0
    %138 = vperm.xlu0 %137, %v124
    %v139 = vpop.permute.xlu0 %138
    %141 = vset.pattern.permute.xlu0 0
    %142 = vperm.xlu0 %141, %v128
    %v143 = vpop.permute.xlu0 %142
    %145 = vset.pattern.permute.xlu0 0
    %146 = vperm.xlu0 %145, %v132
    %v147 = vpop.permute.xlu0 %146
    %v149 = vadd.f32 %v93, %v135
    %v150 = vadd.f32 %v94, %v135
    %v151 = vadd.f32 %v95, %v139
    %v152 = vadd.f32 %v96, %v139
    %v153 = vadd.f32 %v97, %v143
    %v154 = vadd.f32 %v98, %v143
    %v155 = vadd.f32 %v99, %v147
    %v156 = vadd.f32 %v100, %v147
    %v157 = vadd.f32 %v101, %v135
    %v158 = vadd.f32 %v102, %v135
    %v159 = vadd.f32 %v103, %v139
    %v160 = vadd.f32 %v104, %v139
    %v161 = vadd.f32 %v105, %v143
    %v162 = vadd.f32 %v106, %v143
    %v163 = vadd.f32 %v107, %v147
    %v164 = vadd.f32 %v108, %v147
    %v165 = vmax.f32 %v149, 0.0
    %v166 = vmax.f32 %v150, 0.0
    %v167 = vmax.f32 %v151, 0.0
    %v168 = vmax.f32 %v152, 0.0
    %v169 = vmax.f32 %v153, 0.0
    %v170 = vmax.f32 %v154, 0.0
    %v171 = vmax.f32 %v155, 0.0
    %v172 = vmax.f32 %v156, 0.0
    %v173 = vmax.f32 %v157, 0.0
    %v174 = vmax.f32 %v158, 0.0
    %v175 = vmax.f32 %v159, 0.0
    %v176 = vmax.f32 %v160, 0.0
    %v177 = vmax.f32 %v161, 0.0
    %v178 = vmax.f32 %v162, 0.0
    %v179 = vmax.f32 %v163, 0.0
    %v180 = vmax.f32 %v164, 0.0
    %v181 = vlaneseq
    %v182 = vand.u32 %v181, 127
    %vm183 = vcmp.eq.s32.totalorder %v182, 0
    %vm184 = vcmask 1047680
    %185 = vrot.lane.b32.xlu0 %v165, 16
    %v186 = vpop.permute.xlu0 %185
    %v187 = vsel %vm184, %v186, %v165
    %188 = vrot.lane.b32.xlu0 %v166, 16
    %v189 = vpop.permute.xlu0 %188
    %v190 = vsel %vm184, %v189, %v166
    %191 = vrot.lane.b32.xlu0 %v167, 16
    %v192 = vpop.permute.xlu0 %191
    %v193 = vsel %vm184, %v192, %v167
    %194 = vrot.lane.b32.xlu0 %v168, 16
    %v195 = vpop.permute.xlu0 %194
    %v196 = vsel %vm184, %v195, %v168
    %197 = vrot.lane.b32.xlu0 %v169, 16
    %v198 = vpop.permute.xlu0 %197
    %v199 = vsel %vm184, %v198, %v169
    %200 = vrot.lane.b32.xlu0 %v170, 16
    %v201 = vpop.permute.xlu0 %200
    %v202 = vsel %vm184, %v201, %v170
    %203 = vrot.lane.b32.xlu0 %v171, 16
    %v204 = vpop.permute.xlu0 %203
    %v205 = vsel %vm184, %v204, %v171
    %206 = vrot.lane.b32.xlu0 %v172, 16
    %v207 = vpop.permute.xlu0 %206
    %v208 = vsel %vm184, %v207, %v172
    %209 = vrot.lane.b32.xlu0 %v173, 16
    %v210 = vpop.permute.xlu0 %209
    %v211 = vsel %vm184, %v210, %v173
    %212 = vrot.lane.b32.xlu0 %v174, 16
    %v213 = vpop.permute.xlu0 %212
    %v214 = vsel %vm184, %v213, %v174
    %215 = vrot.lane.b32.xlu0 %v175, 16
    %v216 = vpop.permute.xlu0 %215
    %v217 = vsel %vm184, %v216, %v175
    %218 = vrot.lane.b32.xlu0 %v176, 16
    %v219 = vpop.permute.xlu0 %218
    %v220 = vsel %vm184, %v219, %v176
    %221 = vrot.lane.b32.xlu0 %v177, 16
    %v222 = vpop.permute.xlu0 %221
    %v223 = vsel %vm184, %v222, %v177
    %224 = vrot.lane.b32.xlu0 %v178, 16
    %v225 = vpop.permute.xlu0 %224
    %v226 = vsel %vm184, %v225, %v178
    %227 = vrot.lane.b32.xlu0 %v179, 16
    %v228 = vpop.permute.xlu0 %227
    %v229 = vsel %vm184, %v228, %v179
    %230 = vrot.lane.b32.xlu0 %v180, 16
    %v231 = vpop.permute.xlu0 %230
    %v232 = vsel %vm184, %v231, %v180
    %233 = vrot.lane.b32.xlu0 %v187, 16
    %v234 = vpop.permute.xlu0 %233
    %235 = vrot.lane.b32.xlu0 %v190, 16
    %v236 = vpop.permute.xlu0 %235
    %237 = vrot.lane.b32.xlu0 %v193, 16
    %v238 = vpop.permute.xlu0 %237
    %239 = vrot.lane.b32.xlu0 %v196, 16
    %v240 = vpop.permute.xlu0 %239
    %241 = vrot.lane.b32.xlu0 %v199, 16
    %v242 = vpop.permute.xlu0 %241
    %243 = vrot.lane.b32.xlu0 %v202, 16
    %v244 = vpop.permute.xlu0 %243
    %245 = vrot.lane.b32.xlu0 %v205, 16
    %v246 = vpop.permute.xlu0 %245
    %247 = vrot.lane.b32.xlu0 %v208, 16
    %v248 = vpop.permute.xlu0 %247
    %249 = vrot.lane.b32.xlu0 %v211, 16
    %v250 = vpop.permute.xlu0 %249
    %251 = vrot.lane.b32.xlu0 %v214, 16
    %v252 = vpop.permute.xlu0 %251
    %253 = vrot.lane.b32.xlu0 %v217, 16
    %v254 = vpop.permute.xlu0 %253
    %255 = vrot.lane.b32.xlu0 %v220, 16
    %v256 = vpop.permute.xlu0 %255
    %257 = vrot.lane.b32.xlu0 %v223, 16
    %v258 = vpop.permute.xlu0 %257
    %259 = vrot.lane.b32.xlu0 %v226, 16
    %v260 = vpop.permute.xlu0 %259
    %261 = vrot.lane.b32.xlu0 %v229, 16
    %v262 = vpop.permute.xlu0 %261
    %263 = vrot.lane.b32.xlu0 %v232, 16
    %v264 = vpop.permute.xlu0 %263
    %v265 = vsel %vm184, %v234, %v165
    %v266 = vsel %vm184, %v236, %v166
    %v267 = vsel %vm184, %v238, %v167
    %v268 = vsel %vm184, %v240, %v168
    %v269 = vsel %vm184, %v242, %v169
    %v270 = vsel %vm184, %v244, %v170
    %v271 = vsel %vm184, %v246, %v171
    %v272 = vsel %vm184, %v248, %v172
    %v273 = vsel %vm184, %v250, %v173
    %v274 = vsel %vm184, %v252, %v174
    %v275 = vsel %vm184, %v254, %v175
    %v276 = vsel %vm184, %v256, %v176
    %v277 = vsel %vm184, %v258, %v177
    %v278 = vsel %vm184, %v260, %v178
    %v279 = vsel %vm184, %v262, %v179
    %v280 = vsel %vm184, %v264, %v180
    %297 = vrot.lane.b32.xlu0 %v265, 113
    %v298 = vpop.permute.xlu0 %297
    %299 = vrot.lane.b32.xlu0 %v266, 113
    %v300 = vpop.permute.xlu0 %299
    %301 = vrot.lane.b32.xlu0 %v267, 113
    %v302 = vpop.permute.xlu0 %301
    %303 = vrot.lane.b32.xlu0 %v268, 113
    %v304 = vpop.permute.xlu0 %303
    %305 = vrot.lane.b32.xlu0 %v269, 113
    %v306 = vpop.permute.xlu0 %305
    %307 = vrot.lane.b32.xlu0 %v270, 113
    %v308 = vpop.permute.xlu0 %307
    %309 = vrot.lane.b32.xlu0 %v271, 113
    %v310 = vpop.permute.xlu0 %309
    %311 = vrot.lane.b32.xlu0 %v272, 113
    %v312 = vpop.permute.xlu0 %311
    %313 = vrot.lane.b32.xlu0 %v273, 113
    %v314 = vpop.permute.xlu0 %313
    %315 = vrot.lane.b32.xlu0 %v274, 113
    %v316 = vpop.permute.xlu0 %315
    %317 = vrot.lane.b32.xlu0 %v275, 113
    %v318 = vpop.permute.xlu0 %317
    %319 = vrot.lane.b32.xlu0 %v276, 113
    %v320 = vpop.permute.xlu0 %319
    %321 = vrot.lane.b32.xlu0 %v277, 113
    %v322 = vpop.permute.xlu0 %321
    %323 = vrot.lane.b32.xlu0 %v278, 113
    %v324 = vpop.permute.xlu0 %323
    %325 = vrot.lane.b32.xlu0 %v279, 113
    %v326 = vpop.permute.xlu0 %325
    %327 = vrot.lane.b32.xlu0 %v280, 113
    %v328 = vpop.permute.xlu0 %327
    %v345 = vsel %vm183, %v165, %v298
    %v346 = vsel %vm183, %v166, %v300
    %v347 = vsel %vm183, %v167, %v302
    %v348 = vsel %vm183, %v168, %v304
    %v349 = vsel %vm183, %v169, %v306
    %v350 = vsel %vm183, %v170, %v308
    %v351 = vsel %vm183, %v171, %v310
    %v352 = vsel %vm183, %v172, %v312
    %v353 = vsel %vm183, %v173, %v314
    %v354 = vsel %vm183, %v174, %v316
    %v355 = vsel %vm183, %v175, %v318
    %v356 = vsel %vm183, %v176, %v320
    %v357 = vsel %vm183, %v177, %v322
    %v358 = vsel %vm183, %v178, %v324
    %v359 = vsel %vm183, %v179, %v326
    %v360 = vsel %vm183, %v180, %v328
    %vm361 = vcmp.eq.s32.totalorder %v182, 15
    %362 = vrot.lane.b32.xlu0 %v265, 127
    %v363 = vpop.permute.xlu0 %362
    %364 = vrot.lane.b32.xlu0 %v266, 127
    %v365 = vpop.permute.xlu0 %364
    %366 = vrot.lane.b32.xlu0 %v267, 127
    %v367 = vpop.permute.xlu0 %366
    %368 = vrot.lane.b32.xlu0 %v268, 127
    %v369 = vpop.permute.xlu0 %368
    %370 = vrot.lane.b32.xlu0 %v269, 127
    %v371 = vpop.permute.xlu0 %370
    %372 = vrot.lane.b32.xlu0 %v270, 127
    %v373 = vpop.permute.xlu0 %372
    %374 = vrot.lane.b32.xlu0 %v271, 127
    %v375 = vpop.permute.xlu0 %374
    %376 = vrot.lane.b32.xlu0 %v272, 127
    %v377 = vpop.permute.xlu0 %376
    %378 = vrot.lane.b32.xlu0 %v273, 127
    %v379 = vpop.permute.xlu0 %378
    %380 = vrot.lane.b32.xlu0 %v274, 127
    %v381 = vpop.permute.xlu0 %380
    %382 = vrot.lane.b32.xlu0 %v275, 127
    %v383 = vpop.permute.xlu0 %382
    %384 = vrot.lane.b32.xlu0 %v276, 127
    %v385 = vpop.permute.xlu0 %384
    %386 = vrot.lane.b32.xlu0 %v277, 127
    %v387 = vpop.permute.xlu0 %386
    %388 = vrot.lane.b32.xlu0 %v278, 127
    %v389 = vpop.permute.xlu0 %388
    %390 = vrot.lane.b32.xlu0 %v279, 127
    %v391 = vpop.permute.xlu0 %390
    %392 = vrot.lane.b32.xlu0 %v280, 127
    %v393 = vpop.permute.xlu0 %392
    %v410 = vsel %vm361, %v165, %v363
    %v411 = vsel %vm361, %v166, %v365
    %v412 = vsel %vm361, %v167, %v367
    %v413 = vsel %vm361, %v168, %v369
    %v414 = vsel %vm361, %v169, %v371
    %v415 = vsel %vm361, %v170, %v373
    %v416 = vsel %vm361, %v171, %v375
    %v417 = vsel %vm361, %v172, %v377
    %v418 = vsel %vm361, %v173, %v379
    %v419 = vsel %vm361, %v174, %v381
    %v420 = vsel %vm361, %v175, %v383
    %v421 = vsel %vm361, %v176, %v385
    %v422 = vsel %vm361, %v177, %v387
    %v423 = vsel %vm361, %v178, %v389
    %v424 = vsel %vm361, %v179, %v391
    %v425 = vsel %vm361, %v180, %v393
    %v426 = vmax.f32 %v345, %v410
    %v427 = vmax.f32 %v346, %v411
    %v428 = vmax.f32 %v347, %v412
    %v429 = vmax.f32 %v348, %v413
    %v430 = vmax.f32 %v349, %v414
    %v431 = vmax.f32 %v350, %v415
    %v432 = vmax.f32 %v351, %v416
    %v433 = vmax.f32 %v352, %v417
    %v434 = vmax.f32 %v353, %v418
    %v435 = vmax.f32 %v354, %v419
    %v436 = vmax.f32 %v355, %v420
    %v437 = vmax.f32 %v356, %v421
    %v438 = vmax.f32 %v357, %v422
    %v439 = vmax.f32 %v358, %v423
    %v440 = vmax.f32 %v359, %v424
    %v441 = vmax.f32 %v360, %v425
    %v442 = vmax.f32 %v426, %v165
    %v443 = vmax.f32 %v427, %v166
    %v444 = vmax.f32 %v428, %v167
    %v445 = vmax.f32 %v429, %v168
    %v446 = vmax.f32 %v430, %v169
    %v447 = vmax.f32 %v431, %v170
    %v448 = vmax.f32 %v432, %v171
    %v449 = vmax.f32 %v433, %v172
    %v450 = vmax.f32 %v434, %v173
    %v451 = vmax.f32 %v435, %v174
    %v452 = vmax.f32 %v436, %v175
    %v453 = vmax.f32 %v437, %v176
    %v454 = vmax.f32 %v438, %v177
    %v455 = vmax.f32 %v439, %v178
    %v456 = vmax.f32 %v440, %v179
    %v457 = vmax.f32 %v441, %v180
    %v458 = vlaneseq
    %v459 = vshrl.u32 %v458, 7
    %v460 = vadd.s32 %v459, 8
    %vm461 = vcmp.eq.s32.totalorder %v459, 0
    %vm462 = vcmp.eq.s32.totalorder %v460, 0
    %v463 = vrot.slane %v442, 7
    %v464 = vrot.slane %v444, 7
    %v465 = vrot.slane %v446, 7
    %v466 = vrot.slane %v448, 7
    %v467 = vrot.slane %v450, 7
    %v468 = vrot.slane %v452, 7
    %v469 = vrot.slane %v454, 7
    %v470 = vrot.slane %v456, 7
    %v471 = vrot.slane %v443, 7
    %v472 = vrot.slane %v445, 7
    %v473 = vrot.slane %v447, 7
    %v474 = vrot.slane %v449, 7
    %v475 = vrot.slane %v451, 7
    %v476 = vrot.slane %v453, 7
    %v477 = vrot.slane %v455, 7
    %v478 = vrot.slane %v457, 7
    %vm479 = vcmp.lt.s32.totalorder %v459, 1
    %v480 = vsel %vm479, %v463, %v471
    %v481 = vsel %vm479, %v464, %v472
    %v482 = vsel %vm479, %v465, %v473
    %v483 = vsel %vm479, %v466, %v474
    %v484 = vsel %vm479, %v467, %v475
    %v485 = vsel %vm479, %v468, %v476
    %v486 = vsel %vm479, %v469, %v477
    %v487 = vsel %vm479, %v470, %v478
    %v488 = vsel %vm479, %v471, %v463
    %v489 = vsel %vm479, %v472, %v464
    %v490 = vsel %vm479, %v473, %v465
    %v491 = vsel %vm479, %v474, %v466
    %v492 = vsel %vm479, %v475, %v467
    %v493 = vsel %vm479, %v476, %v468
    %v494 = vsel %vm479, %v477, %v469
    %v495 = vsel %vm479, %v478, %v470
    %v496 = vsel %vm461, %v442, %v488
    %v497 = vsel %vm462, %v443, %v480
    %v498 = vsel %vm461, %v444, %v489
    %v499 = vsel %vm462, %v445, %v481
    %v500 = vsel %vm461, %v446, %v490
    %v501 = vsel %vm462, %v447, %v482
    %v502 = vsel %vm461, %v448, %v491
    %v503 = vsel %vm462, %v449, %v483
    %v504 = vsel %vm461, %v450, %v492
    %v505 = vsel %vm462, %v451, %v484
    %v506 = vsel %vm461, %v452, %v493
    %v507 = vsel %vm462, %v453, %v485
    %v508 = vsel %vm461, %v454, %v494
    %v509 = vsel %vm462, %v455, %v486
    %v510 = vsel %vm461, %v456, %v495
    %v511 = vsel %vm462, %v457, %v487
    %vm512 = vcmp.eq.s32.totalorder %v459, 15
    %vm513 = vcmp.eq.s32.totalorder %v460, 15
    %v514 = vrot.slane %v442, 1
    %v515 = vrot.slane %v444, 1
    %v516 = vrot.slane %v446, 1
    %v517 = vrot.slane %v448, 1
    %v518 = vrot.slane %v450, 1
    %v519 = vrot.slane %v452, 1
    %v520 = vrot.slane %v454, 1
    %v521 = vrot.slane %v456, 1
    %v522 = vrot.slane %v443, 1
    %v523 = vrot.slane %v445, 1
    %v524 = vrot.slane %v447, 1
    %v525 = vrot.slane %v449, 1
    %v526 = vrot.slane %v451, 1
    %v527 = vrot.slane %v453, 1
    %v528 = vrot.slane %v455, 1
    %v529 = vrot.slane %v457, 1
    %vm530 = vcmp.lt.s32.totalorder %v459, 7
    %v531 = vsel %vm530, %v514, %v522
    %v532 = vsel %vm530, %v515, %v523
    %v533 = vsel %vm530, %v516, %v524
    %v534 = vsel %vm530, %v517, %v525
    %v535 = vsel %vm530, %v518, %v526
    %v536 = vsel %vm530, %v519, %v527
    %v537 = vsel %vm530, %v520, %v528
    %v538 = vsel %vm530, %v521, %v529
    %v539 = vsel %vm530, %v522, %v514
    %v540 = vsel %vm530, %v523, %v515
    %v541 = vsel %vm530, %v524, %v516
    %v542 = vsel %vm530, %v525, %v517
    %v543 = vsel %vm530, %v526, %v518
    %v544 = vsel %vm530, %v527, %v519
    %v545 = vsel %vm530, %v528, %v520
    %v546 = vsel %vm530, %v529, %v521
    %v547 = vsel %vm512, %v442, %v531
    %v548 = vsel %vm513, %v443, %v539
    %v549 = vsel %vm512, %v444, %v532
    %v550 = vsel %vm513, %v445, %v540
    %v551 = vsel %vm512, %v446, %v533
    %v552 = vsel %vm513, %v447, %v541
    %v553 = vsel %vm512, %v448, %v534
    %v554 = vsel %vm513, %v449, %v542
    %v555 = vsel %vm512, %v450, %v535
    %v556 = vsel %vm513, %v451, %v543
    %v557 = vsel %vm512, %v452, %v536
    %v558 = vsel %vm513, %v453, %v544
    %v559 = vsel %vm512, %v454, %v537
    %v560 = vsel %vm513, %v455, %v545
    %v561 = vsel %vm512, %v456, %v538
    %v562 = vsel %vm513, %v457, %v546
    %v563 = vmax.f32 %v496, %v547
    %v564 = vmax.f32 %v497, %v548
    %v565 = vmax.f32 %v498, %v549
    %v566 = vmax.f32 %v499, %v550
    %v567 = vmax.f32 %v500, %v551
    %v568 = vmax.f32 %v501, %v552
    %v569 = vmax.f32 %v502, %v553
    %v570 = vmax.f32 %v503, %v554
    %v571 = vmax.f32 %v504, %v555
    %v572 = vmax.f32 %v505, %v556
    %v573 = vmax.f32 %v506, %v557
    %v574 = vmax.f32 %v507, %v558
    %v575 = vmax.f32 %v508, %v559
    %v576 = vmax.f32 %v509, %v560
    %v577 = vmax.f32 %v510, %v561
    %v578 = vmax.f32 %v511, %v562
    %v579 = vmax.f32 %v563, %v442
    %v580 = vmax.f32 %v564, %v443
    %v581 = vmax.f32 %v565, %v444
    %v582 = vmax.f32 %v566, %v445
    %v583 = vmax.f32 %v567, %v446
    %v584 = vmax.f32 %v568, %v447
    %v585 = vmax.f32 %v569, %v448
    %v586 = vmax.f32 %v570, %v449
    %v587 = vmax.f32 %v571, %v450
    %v588 = vmax.f32 %v572, %v451
    %v589 = vmax.f32 %v573, %v452
    %v590 = vmax.f32 %v574, %v453
    %v591 = vmax.f32 %v575, %v454
    %v592 = vmax.f32 %v576, %v455
    %v593 = vmax.f32 %v577, %v456
    %v594 = vmax.f32 %v578, %v457
    %v595 = vld [vmem:[%s3] sm:$0x1]
    %v596 = vld [vmem:[%s3 + $0x1] sm:$0x1]
    %v597 = vld [vmem:[%s3 + $0x2] sm:$0x1]
    %v598 = vld [vmem:[%s3 + $0x3] sm:$0x1]
    %v603 = vlaneseq
    %v604 = vshrl.u32 %v603, 7
    %v605 = vsub.s32 0, %v604
    %v606 = vrot.slane %v595, %v605
    %v607 = vlaneseq
    %v608 = vshrl.u32 %v607, 7
    %v609 = vsub.s32 0, %v608
    %v610 = vrot.slane %v596, %v609
    %v611 = vlaneseq
    %v612 = vshrl.u32 %v611, 7
    %v613 = vsub.s32 0, %v612
    %v614 = vrot.slane %v597, %v613
    %v615 = vlaneseq
    %v616 = vshrl.u32 %v615, 7
    %v617 = vsub.s32 0, %v616
    %v618 = vrot.slane %v598, %v617
    %619 = vset.pattern.permute.xlu0 0
    %620 = vperm.xlu0 %619, %v606
    %v621 = vpop.permute.xlu0 %620
    %623 = vset.pattern.permute.xlu0 0
    %624 = vperm.xlu0 %623, %v610
    %v625 = vpop.permute.xlu0 %624
    %627 = vset.pattern.permute.xlu0 0
    %628 = vperm.xlu0 %627, %v614
    %v629 = vpop.permute.xlu0 %628
    %631 = vset.pattern.permute.xlu0 0
    %632 = vperm.xlu0 %631, %v618
    %v633 = vpop.permute.xlu0 %632
    %v635 = vmul.f32 %v579, %v621
    %v636 = vmul.f32 %v580, %v621
    %v637 = vmul.f32 %v581, %v625
    %v638 = vmul.f32 %v582, %v625
    %v639 = vmul.f32 %v583, %v629
    %v640 = vmul.f32 %v584, %v629
    %v641 = vmul.f32 %v585, %v633
    %v642 = vmul.f32 %v586, %v633
    %v643 = vmul.f32 %v587, %v621
    %v644 = vmul.f32 %v588, %v621
    %v645 = vmul.f32 %v589, %v625
    %v646 = vmul.f32 %v590, %v625
    %v647 = vmul.f32 %v591, %v629
    %v648 = vmul.f32 %v592, %v629
    %v649 = vmul.f32 %v593, %v633
    %v650 = vmul.f32 %v594, %v633
    %vm651 = vcmask 130048
    %v652 = vsel %vm651, %v635, 0.0
    %v653 = vsel %vm651, %v637, 0.0
    %v654 = vadd.f32 %v652, %v653
    %v655 = vsel %vm651, %v639, 0.0
    %v656 = vadd.f32 %v654, %v655
    %v657 = vsel %vm651, %v641, 0.0
    %v658 = vadd.f32 %v656, %v657
    %v659 = vsel %vm651, %v636, 0.0
    %v660 = vsel %vm651, %v638, 0.0
    %v661 = vadd.f32 %v659, %v660
    %v662 = vsel %vm651, %v640, 0.0
    %v663 = vadd.f32 %v661, %v662
    %v664 = vsel %vm651, %v642, 0.0
    %v665 = vadd.f32 %v663, %v664
    %v666 = vsel %vm651, %v643, 0.0
    %v667 = vsel %vm651, %v645, 0.0
    %v668 = vadd.f32 %v666, %v667
    %v669 = vsel %vm651, %v647, 0.0
    %v670 = vadd.f32 %v668, %v669
    %v671 = vsel %vm651, %v649, 0.0
    %v672 = vadd.f32 %v670, %v671
    %v673 = vsel %vm651, %v644, 0.0
    %v674 = vsel %vm651, %v646, 0.0
    %v675 = vadd.f32 %v673, %v674
    %v676 = vsel %vm651, %v648, 0.0
    %v677 = vadd.f32 %v675, %v676
    %v678 = vsel %vm651, %v650, 0.0
    %v679 = vadd.f32 %v677, %v678
    %v680 = vld [vmem:[#allocation2] sm:$0x1]
    %v682 = vlaneseq
    %v683 = vshrl.u32 %v682, 7
    %v684 = vsub.s32 0, %v683
    %v685 = vrot.slane %v680, %v684
    %686 = vset.pattern.permute.xlu0 0
    %687 = vperm.xlu0 %686, %v685
    %v688 = vpop.permute.xlu0 %687
    %v690 = vadd.f32 %v658, %v688
    %v691 = vadd.f32 %v665, %v688
    %v692 = vadd.f32 %v672, %v688
    %v693 = vadd.f32 %v679, %v688
    %v694 = vmax.f32 %v690, 0.0
    %v695 = vmax.f32 %v691, 0.0
    %v696 = vmax.f32 %v692, 0.0
    %v697 = vmax.f32 %v693, 0.0
    %v698 = vsel %vm651, %v694, -inf
    %699 = vmax.xlane.f32.xlu0 %v698
    %v700 = vpop.xlane.xlu0 %699
    %v701 = vsel %vm651, %v695, -inf
    %702 = vmax.xlane.f32.xlu0 %v701
    %v703 = vpop.xlane.xlu0 %702
    %v704 = vsel %vm651, %v696, -inf
    %705 = vmax.xlane.f32.xlu0 %v704
    %v706 = vpop.xlane.xlu0 %705
    %v707 = vsel %vm651, %v697, -inf
    %708 = vmax.xlane.f32.xlu0 %v707
    %v709 = vpop.xlane.xlu0 %708
    %v710 = vmax.f32 %v700, %v703
    %v711 = vrot.slane %v710, 4
    %v712 = vmax.f32 %v710, %v711
    %v713 = vrot.slane %v712, 2
    %v714 = vmax.f32 %v712, %v713
    %v715 = vrot.slane %v714, 1
    %v716 = vmax.f32 %v714, %v715
    %v717 = vmax.f32 %v706, %v709
    %v718 = vrot.slane %v717, 4
    %v719 = vmax.f32 %v717, %v718
    %v720 = vrot.slane %v719, 2
    %v721 = vmax.f32 %v719, %v720
    %v722 = vrot.slane %v721, 1
    %v723 = vmax.f32 %v721, %v722
    %v724 = vsub.f32 %v694, %v716
    %v725 = vsub.f32 %v695, %v716
    %v726 = vsub.f32 %v696, %v723
    %v727 = vsub.f32 %v697, %v723
    %v728 = vmul.f32 %v724, 1.442695
    %v729 = vpow.pop %v728
    %v730 = vmul.f32 %v725, 1.442695
    %v731 = vpow.pop %v730
    %v732 = vmul.f32 %v726, 1.442695
    %v733 = vpow.pop %v732
    %v734 = vmul.f32 %v727, 1.442695
    %v735 = vpow.pop %v734
    %v736 = vsel %vm651, %v729, 0.0
    %737 = vadd.xlane.f32.xlu0 %v736
    %v738 = vpop.xlane.xlu0 %737
    %v739 = vsel %vm651, %v731, 0.0
    %740 = vadd.xlane.f32.xlu0 %v739
    %v741 = vpop.xlane.xlu0 %740
    %v742 = vsel %vm651, %v733, 0.0
    %743 = vadd.xlane.f32.xlu0 %v742
    %v744 = vpop.xlane.xlu0 %743
    %v745 = vsel %vm651, %v735, 0.0
    %746 = vadd.xlane.f32.xlu0 %v745
    %v747 = vpop.xlane.xlu0 %746
    %v748 = vadd.f32 %v738, %v741
    %v749 = vrot.slane %v748, 4
    %v750 = vadd.f32 %v748, %v749
    %v751 = vrot.slane %v750, 2
    %v752 = vadd.f32 %v750, %v751
    %v753 = vrot.slane %v752, 1
    %v754 = vadd.f32 %v752, %v753
    %v755 = vadd.f32 %v744, %v747
    %v756 = vrot.slane %v755, 4
    %v757 = vadd.f32 %v755, %v756
    %v758 = vrot.slane %v757, 2
    %v759 = vadd.f32 %v757, %v758
    %v760 = vrot.slane %v759, 1
    %v761 = vadd.f32 %v759, %v760
    %v762 = vrcp.pop %v754
    %v763 = vmul.f32 %v729, %v762
    %v764 = vmul.f32 %v731, %v762
    %v765 = vrcp.pop %v761
    %v766 = vmul.f32 %v733, %v765
    %v767 = vmul.f32 %v735, %v765
    %v768 = vadd.f32 %v763, 1.0
    %v769 = vadd.f32 %v764, 1.0
    %v770 = vadd.f32 %v766, 1.0
    %v771 = vadd.f32 %v767, 1.0
    %v772 = vmul.f32 %v37, %v768
    %v773 = vmul.f32 %v38, %v769
    %v774 = vmul.f32 %v39, %v768
    %v775 = vmul.f32 %v40, %v769
    %v776 = vmul.f32 %v41, %v768
    %v777 = vmul.f32 %v42, %v769
    %v778 = vmul.f32 %v43, %v768
    %v779 = vmul.f32 %v44, %v769
    %v780 = vmul.f32 %v45, %v770
    %v781 = vmul.f32 %v46, %v771
    %v782 = vmul.f32 %v47, %v770
    %v783 = vmul.f32 %v48, %v771
    %v784 = vmul.f32 %v49, %v770
    %v785 = vmul.f32 %v50, %v771
    %v786 = vmul.f32 %v51, %v770
    %v787 = vmul.f32 %v52, %v771
    %788 = vst.msk [vmem:[#allocation6] sm:$0xff] %vm651, %v772
    %789 = vst.msk [vmem:[#allocation6 + $0x8] sm:$0xff] %vm651, %v773
    %790 = vst.msk [vmem:[#allocation6 + $0x10] sm:$0xff] %vm651, %v774
    %791 = vst.msk [vmem:[#allocation6 + $0x18] sm:$0xff] %vm651, %v775
    %792 = vst.msk [vmem:[#allocation6 + $0x20] sm:$0xff] %vm651, %v776
    %793 = vst.msk [vmem:[#allocation6 + $0x28] sm:$0xff] %vm651, %v777
    %794 = vst.msk [vmem:[#allocation6 + $0x30] sm:$0xff] %vm651, %v778
    %795 = vst.msk [vmem:[#allocation6 + $0x38] sm:$0xff] %vm651, %v779
    %796 = vst.msk [vmem:[#allocation6 + $0x40] sm:$0xff] %vm651, %v780
    %797 = vst.msk [vmem:[#allocation6 + $0x48] sm:$0xff] %vm651, %v781
    %798 = vst.msk [vmem:[#allocation6 + $0x50] sm:$0xff] %vm651, %v782
    %799 = vst.msk [vmem:[#allocation6 + $0x58] sm:$0xff] %vm651, %v783
    %800 = vst.msk [vmem:[#allocation6 + $0x60] sm:$0xff] %vm651, %v784
    %801 = vst.msk [vmem:[#allocation6 + $0x68] sm:$0xff] %vm651, %v785
    %802 = vst.msk [vmem:[#allocation6 + $0x70] sm:$0xff] %vm651, %v786
    %803 = vst.msk [vmem:[#allocation6 + $0x78] sm:$0xff] %vm651, %v787
    // Predicated region
    $region26: #{tpu_custom_call.1} parent=1 // pred_check
      _
    $region27: #{tpu_custom_call.1} parent=1 // pred_check_branch
      %805 = sbr.rel (0) target = $region29
    $region28: #{tpu_custom_call.1} parent=1 // pred_region
      %s807 = ssub.s32 2048, 2048
      %808 = vsyncadd [#allocation5], %s807
      %s809 = sshll.u32 [#allocation6], 4
      %s810 = int_to_ptr.vmem [resolvable:$true] %s809
      %815 = dma.vmem_to_hbm [thread:$0]  %s810, 2048, %s5, [#allocation5], 128, 128, 8
    $region29: #{tpu_custom_call.1} parent=1 // pred_fallthru
      _
    // Predicated region
    $region30: #{tpu_custom_call.1} parent=1 // pred_check
      _
    $region31: #{tpu_custom_call.1} parent=1 // pred_check_branch
      %817 = sbr.rel (0) target = $region33
    $region32: #{tpu_custom_call.1} parent=1 // pred_region
      %818 = dma.done [#allocation5], 2048
    $region33: #{tpu_custom_call.1} parent=1 // pred_fallthru
      _
    %819 = vsyncpa [#allocation4], 1
    %820 = vsyncpa [#allocation5], 1

</llo_original>
